<compile_context>
chip_gen: v7x
topology: tpu7x:2x2x1
jax: 0.10.0
libtpu: 0.0.40
codegen_flags: <defaults>
</compile_context>

<pallas_src>
import functools

import jax
import jax.numpy as jnp
from jax.experimental import pallas as pl
from jax.experimental.pallas import tpu as pltpu


# ----------------------------------------------------------------------------- helpers
def _round_up(x, m):
    return ((x + m - 1) // m) * m


def _round_down(x, m):
    return (x // m) * m


def _block_diag(mats):
    dtype = jnp.result_type(*mats)
    rows = sum(m.shape[0] for m in mats)
    cols = sum(m.shape[1] for m in mats)
    out = jnp.zeros((rows, cols), dtype=dtype)
    r = c = 0
    for m in mats:
        out = out.at[r:r + m.shape[0], c:c + m.shape[1]].set(m.astype(dtype))
        r += m.shape[0]
        c += m.shape[1]
    return out


def _pick_batch_tile(batch, block_batch, per_row_bytes, resident_bytes, vmem_limit):
    """VMEM-aware, 128-aligned batch tile with >= 2 grid blocks when possible."""
    tb = min(block_batch, batch)
    # Guarantee >= 2 grid blocks when the batch is big enough so the 1-D
    # "parallel" grid shards across v7x's two TensorCores (costs ~0.35us extra
    # on single-core chips, buys up to 2x on v7x).
    if batch >= 256:
        tb = min(tb, _round_up(-(-batch // 2), 128))
    # VMEM budget: resident params + double-buffered x/out streams + f32
    # intermediates must fit under the scoped limit (with headroom).
    avail = vmem_limit - resident_bytes - (2 << 20)
    if avail > 0 and per_row_bytes > 0:
        tb = min(tb, max(8, avail // per_row_bytes))
    # Lane/sublane-friendly alignment whenever we actually tile the batch.
    if tb < batch:
        tb = _round_down(tb, 128) if tb >= 128 else max(8, _round_down(tb, 8))
    return max(1, min(int(tb), batch))


# ----------------------------------------------------------------------------- kernel
def _lrtf_kernel(*refs, group_sizes, ro, out_dim, rank, matmul_epilogue):
    """refs = (x_0, fac_0, row0_0, ..., x_{G-1}, fac_{G-1}, row0_{G-1},
               [red,] bias, out).

    Each "group" is either one modality or several modalities merged into a
    block-diagonal weight; group g's matmul produces group_sizes[g] chunks of
    width ro = rank*out_dim which are multiplied into the running product.
    """
    out_ref = refs[-1]
    n_groups = len(group_sizes)
    base = 3 * n_groups

    fused = None
    for g in range(n_groups):
        x = refs[3 * g][...]                 # (tb, d_g)           input dtype
        fac = refs[3 * g + 1][...]           # (d_g, m_g*ro)       input dtype
        row0 = refs[3 * g + 2][...]          # (1, m_g*ro)         f32 (pre-cast)
        z = jnp.dot(x, fac, preferred_element_type=jnp.float32) + row0
        for m in range(group_sizes[g]):
            zm = z[:, m * ro:(m + 1) * ro] if group_sizes[g] > 1 else z
            fused = zm if fused is None else fused * zm      # f32 product

    if matmul_epilogue:
        red = refs[base][...]                # (ro, out_dim) f32 (pre-cast, tiny)
        bias = refs[base + 1][...]           # (1, out_dim)  f32 (pre-cast)
        out = jnp.dot(fused, red, preferred_element_type=jnp.float32) + bias
    else:
        # fusion_weights were folded into modality 0's factor -> plain rank-sum.
        bias = refs[base][...]               # (1, out_dim) f32 (pre-cast)
        acc = fused[:, 0:out_dim]
        for r in range(1, rank):
            acc = acc + fused[:, r * out_dim:(r + 1) * out_dim]
        out = acc + bias

    out_ref[...] = out.astype(out_ref.dtype)


# ----------------------------------------------------------------------------- wrapper
def low_rank_tensor_fusion(modalities, factors, fusion_weights, fusion_bias,
                           *, flatten=True, block_batch=512):
    """modalities: list of arrays (batch, ...); factors[i]: (rank, d_i+1, output_dim)."""
    batch = modalities[0].shape[0]
    rank, _, output_dim = factors[0].shape
    n = len(modalities)
    ro = rank * output_dim

    # Flatten only; no ones-concat, no dtype upcast (bf16 inputs stay bf16).
    xs = [m.reshape(batch, -1) if flatten else m for m in modalities]
    dims = [int(x.shape[1]) for x in xs]

    # Epilogue selection: lane-aligned per-rank slice-sum when possible;
    # tiny dense kron matmul only for small / unaligned output dims.
    slice_epilogue = (output_dim % 128 == 0)

    param_dtype = factors[0].dtype
    w = fusion_weights.reshape(rank)

    # Per-modality prep: (rank, d+1, O) -> (d, rank*O) weight + (1, rank*O) row0.
    Ws, r0s = [], []
    for i, fac in enumerate(factors):
        Wi = jnp.transpose(fac[:, 1:, :], (1, 0, 2))           # (d_i, rank, O)
        ri = fac[:, 0, :]                                      # (rank, O)
        if slice_epilogue and i == 0:
            # Fold fusion_weights into modality 0: product picks up w[r], so the
            # epilogue becomes a plain sum over rank slices.
            Wi = Wi * w.reshape(1, rank, 1).astype(Wi.dtype)
            ri = ri * w.reshape(rank, 1).astype(ri.dtype)
        Ws.append(Wi.reshape(dims[i], ro))
        r0s.append(ri.reshape(1, ro).astype(jnp.float32))      # tiny, resident, pre-cast

    # Merge small modalities into ONE block-diagonal matmul (1 x-stream, 1 weight).
    merge = (n > 1 and sum(dims) <= 256 and ro % 128 == 0
             and sum(dims) * n * ro * jnp.dtype(param_dtype).itemsize <= (4 << 20))
    if merge:
        groups = [(jnp.concatenate(xs, axis=1),          # (B, sum d_i)
                   _block_diag(Ws),                      # (sum d_i, n*ro)
                   jnp.concatenate(r0s, axis=1),         # (1, n*ro) f32
                   n)]
    else:
        groups = [(xs[i], Ws[i], r0s[i], 1) for i in range(n)]

    # Epilogue parameters (pre-cast to f32 once; no in-kernel casts).
    bias_f32 = fusion_bias.reshape(1, output_dim).astype(jnp.float32)
    if slice_epilogue:
        ep_params = [bias_f32]
    else:
        eye = jnp.eye(output_dim, dtype=jnp.float32)
        red = jnp.kron(w.reshape(rank, 1).astype(jnp.float32), eye)   # (rank*O, O)
        ep_params = [red, bias_f32]

    out_dtype = jnp.result_type(xs[0].dtype, param_dtype, fusion_weights.dtype)
    in_itemsize = jnp.dtype(xs[0].dtype).itemsize
    out_itemsize = jnp.dtype(out_dtype).itemsize

    # Per-generation VMEM limit: 3/4 of physical capped at 96 MiB
    # (v5e/v6e: 96 MiB of 128; v7x: 48 MiB of 64). Conservative fallback.
    try:
        vmem_capacity = int(getattr(pltpu.get_tpu_info(), "vmem_capacity_bytes",
                                    64 * 1024 * 1024))
    except Exception:
        vmem_capacity = 64 * 1024 * 1024
    vmem_limit = max(32 << 20, min(96 << 20, (3 * vmem_capacity) // 4))

    resident_bytes = sum(int(g[1].size) * g[1].dtype.itemsize
                         + int(g[2].size) * 4 for g in groups)
    resident_bytes += sum(int(p.size) * 4 for p in ep_params)
    max_group_width = max(int(g[1].shape[1]) for g in groups)
    stream_row_bytes = 2 * (sum(dims) * in_itemsize + output_dim * out_itemsize)
    interm_row_bytes = (max_group_width + 2 * ro) * 4
    per_row_bytes = stream_row_bytes + interm_row_bytes

    tb = _pick_batch_tile(batch, block_batch, per_row_bytes, resident_bytes, vmem_limit)
    grid = (pl.cdiv(batch, tb),)

    operands, in_specs = [], []
    for (xg, Wg, rg, _) in groups:
        dg, wg = int(Wg.shape[0]), int(Wg.shape[1])
        operands += [xg, Wg, rg]
        in_specs += [
            pl.BlockSpec((tb, dg), lambda b: (b, 0)),
            pl.BlockSpec((dg, wg), lambda b: (0, 0)),   # resident across the grid
            pl.BlockSpec((1, wg), lambda b: (0, 0)),
        ]
    for p in ep_params:
        operands.append(p)
        in_specs.append(pl.BlockSpec(tuple(int(s) for s in p.shape), lambda b: (0, 0)))

    # Advisory cost estimate so XLA overlaps surrounding ops with the kernel.
    mm_flops = sum(2 * batch * int(g[1].shape[0]) * int(g[1].shape[1]) for g in groups)
    prod_flops = batch * ro * max(0, n - 1)
    ep_flops = (2 * batch * ro * output_dim) if not slice_epilogue else (batch * ro)
    cost = pl.CostEstimate(
        flops=int(mm_flops + prod_flops + ep_flops + batch * output_dim),
        transcendentals=0,
        bytes_accessed=int(batch * sum(dims) * in_itemsize
                           + batch * output_dim * out_itemsize
                           + resident_bytes),
    )

    return pl.pallas_call(
        functools.partial(_lrtf_kernel,
                          group_sizes=tuple(g[3] for g in groups),
                          ro=ro, out_dim=output_dim, rank=rank,
                          matmul_epilogue=not slice_epilogue),
        out_shape=jax.ShapeDtypeStruct((batch, output_dim), out_dtype),
        grid=grid,
        in_specs=in_specs,
        out_specs=pl.BlockSpec((tb, output_dim), lambda b: (b, 0)),
        compiler_params=pltpu.CompilerParams(
            dimension_semantics=("parallel",),
            vmem_limit_bytes=int(vmem_limit),
        ),
        cost_estimate=cost,
    )(*operands)


# ----------------------------------------------------------------------------- reference
def _reference(modalities, factors, fusion_weights, fusion_bias, flatten=True):
    """Pure-JAX mirror of the PyTorch forward, for correctness checking."""
    batch = modalities[0].shape[0]
    fused = 1.0
    for m, fac in zip(modalities, factors):
        if flatten:
            m = m.reshape(batch, -1)
        ones = jnp.ones((batch, 1), dtype=m.dtype)
        aug = jnp.concatenate([ones, m], axis=1)              # (B, d+1)
        z = jnp.einsum('bd,rdo->rbo', aug, fac)               # (rank, B, O)
        fused = fused * z
    out = jnp.einsum('kr,bro->bo', fusion_weights,
                     jnp.transpose(fused, (1, 0, 2))) + fusion_bias
    return out.reshape(-1, fusion_bias.shape[-1])


def _build_and_check(key, input_dims, output_dim, rank, batch, atol):
    keys = jax.random.split(key, len(input_dims) + 3)

    # Deterministic "xavier_normal_"-style init for factors (rank, d+1, out_dim).
    factors = []
    for i, d in enumerate(input_dims):
        fan_in = (d + 1) * output_dim
        fan_out = rank * output_dim
        std = (2.0 / (fan_in + fan_out)) ** 0.5
        factors.append(std * jax.random.normal(
            keys[i], (rank, d + 1, output_dim), dtype=jnp.float32))

    std_w = (2.0 / (1 + rank)) ** 0.5
    fusion_weights = std_w * jax.random.normal(keys[-3], (1, rank), jnp.float32)
    fusion_bias = jnp.zeros((1, output_dim), jnp.float32)

    modalities = [
        jax.random.normal(jax.random.fold_in(keys[-2], i), (batch, d), jnp.float32)
        for i, d in enumerate(input_dims)
    ]

    out = low_rank_tensor_fusion(modalities, factors, fusion_weights, fusion_bias)
    out = jax.block_until_ready(out)

    ref = _reference(modalities, factors, fusion_weights, fusion_bias)
    assert out.shape == (batch, output_dim), out.shape
    assert jnp.allclose(out, ref, atol=atol, rtol=1e-2), "mismatch vs reference"


if __name__ == "__main__":
    key = jax.random.PRNGKey(0)
    k1, k2 = jax.random.split(key)

    # Config 1 (module-consistent small shapes): merged block-diagonal matmul +
    # tiny kron epilogue (output_dim=32 is not lane-aligned), single grid block.
    _build_and_check(k1, input_dims=(16, 32), output_dim=32, rank=4, batch=2,
                     atol=1e-3)

    # Config 2: unmerged modalities + lane-aligned per-rank slice-sum epilogue,
    # multi-block batch grid with a partial edge block.
    _build_and_check(k2, input_dims=(300, 40), output_dim=128, rank=4, batch=384,
                     atol=5e-3)

    print("KERNEL_OK")
</pallas_src>

<mosaic_0001>
module attributes {stable_mosaic.version = 11 : i64} {
  func.func @_lrtf_kernel(%arg0: i32, %arg1: memref<2x48xf32, #tpu.memory_space<vmem>>, %arg2: memref<48x256xf32, #tpu.memory_space<vmem>>, %arg3: memref<1x256xf32, #tpu.memory_space<vmem>>, %arg4: memref<128x32xf32, #tpu.memory_space<vmem>>, %arg5: memref<1x32xf32, #tpu.memory_space<vmem>>, %arg6: memref<2x32xf32, #tpu.memory_space<vmem>>) attributes {dimension_semantics = [#tpu.dimension_semantics<parallel>], iteration_bounds = array<i64: 1>, scalar_prefetch = 0 : i64, scratch_operands = 0 : i64, tpu.core_type = #tpu.core_type<tc>, window_params = [{transform_indices = @transform_0, window_bounds = array<i64: 2, 48>}, {pipeline_mode = #tpu.pipeline_mode<synchronous>, transform_indices = @transform_1, window_bounds = array<i64: 48, 256>}, {pipeline_mode = #tpu.pipeline_mode<synchronous>, transform_indices = @transform_2, window_bounds = array<i64: 1, 256>}, {pipeline_mode = #tpu.pipeline_mode<synchronous>, transform_indices = @transform_3, window_bounds = array<i64: 128, 32>}, {pipeline_mode = #tpu.pipeline_mode<synchronous>, transform_indices = @transform_4, window_bounds = array<i64: 1, 32>}, {transform_indices = @transform_5, window_bounds = array<i64: 2, 32>}]} {
    %c0 = arith.constant 0 : index
    %c0_0 = arith.constant 0 : index
    %0 = vector.load %arg1[%c0, %c0_0] : memref<2x48xf32, #tpu.memory_space<vmem>>, vector<2x48xf32>
    %c0_1 = arith.constant 0 : index
    %c0_2 = arith.constant 0 : index
    %1 = vector.load %arg2[%c0_1, %c0_2] : memref<48x256xf32, #tpu.memory_space<vmem>>, vector<48x256xf32>
    %c0_3 = arith.constant 0 : index
    %c0_4 = arith.constant 0 : index
    %2 = vector.load %arg3[%c0_3, %c0_4] : memref<1x256xf32, #tpu.memory_space<vmem>>, vector<1x256xf32>
    %cst = arith.constant dense<0.000000e+00> : vector<2x256xf32>
    %3 = tpu.matmul %0, %1, %cst {dimension_numbers = #tpu.dot_dimension_numbers<[1], [0], [0], [1], [0, 0, 1, 1], [], []>} : vector<2x48xf32>, vector<48x256xf32>, vector<2x256xf32> -> vector<2x256xf32>
    %4 = vector.broadcast %2 : vector<1x256xf32> to vector<2x256xf32>
    %5 = arith.addf %3, %4 : vector<2x256xf32>
    %6 = vector.extract_strided_slice %5 {offsets = [0, 0], sizes = [2, 128], strides = [1, 1]} : vector<2x256xf32> to vector<2x128xf32>
    %7 = vector.extract_strided_slice %5 {offsets = [0, 128], sizes = [2, 128], strides = [1, 1]} : vector<2x256xf32> to vector<2x128xf32>
    %8 = arith.mulf %6, %7 : vector<2x128xf32>
    %c0_5 = arith.constant 0 : index
    %c0_6 = arith.constant 0 : index
    %9 = vector.load %arg4[%c0_5, %c0_6] : memref<128x32xf32, #tpu.memory_space<vmem>>, vector<128x32xf32>
    %c0_7 = arith.constant 0 : index
    %c0_8 = arith.constant 0 : index
    %10 = vector.load %arg5[%c0_7, %c0_8] : memref<1x32xf32, #tpu.memory_space<vmem>>, vector<1x32xf32>
    %cst_9 = arith.constant dense<0.000000e+00> : vector<2x32xf32>
    %11 = tpu.matmul %8, %9, %cst_9 {dimension_numbers = #tpu.dot_dimension_numbers<[1], [0], [0], [1], [0, 0, 1, 1], [], []>} : vector<2x128xf32>, vector<128x32xf32>, vector<2x32xf32> -> vector<2x32xf32>
    %12 = vector.broadcast %10 : vector<1x32xf32> to vector<2x32xf32>
    %13 = arith.addf %11, %12 : vector<2x32xf32>
    %c0_10 = arith.constant 0 : index
    %c0_11 = arith.constant 0 : index
    %14 = vector.load %arg6[%c0_10, %c0_11] : memref<2x32xf32, #tpu.memory_space<vmem>>, vector<2x32xf32>
    tpu.vector_store %arg6[%c0_10, %c0_11], %13 {strides = array<i32>} : memref<2x32xf32, #tpu.memory_space<vmem>>, vector<2x32xf32>,
    return
  }
  func.func @transform_0(%arg0: i32) -> (i32, i32) {
    %c0_i32 = arith.constant 0 : i32
    %c0_i32_0 = arith.constant 0 : i32
    return %arg0, %c0_i32 : i32, i32
  }
  func.func @transform_1(%arg0: i32) -> (i32, i32) {
    %c0_i32 = arith.constant 0 : i32
    %c0_i32_0 = arith.constant 0 : i32
    %c0_i32_1 = arith.constant 0 : i32
    return %c0_i32, %c0_i32_0 : i32, i32
  }
  func.func @transform_2(%arg0: i32) -> (i32, i32) {
    %c0_i32 = arith.constant 0 : i32
    %c0_i32_0 = arith.constant 0 : i32
    %c0_i32_1 = arith.constant 0 : i32
    return %c0_i32, %c0_i32_0 : i32, i32
  }
  func.func @transform_3(%arg0: i32) -> (i32, i32) {
    %c0_i32 = arith.constant 0 : i32
    %c0_i32_0 = arith.constant 0 : i32
    %c0_i32_1 = arith.constant 0 : i32
    return %c0_i32, %c0_i32_0 : i32, i32
  }
  func.func @transform_4(%arg0: i32) -> (i32, i32) {
    %c0_i32 = arith.constant 0 : i32
    %c0_i32_0 = arith.constant 0 : i32
    %c0_i32_1 = arith.constant 0 : i32
    return %c0_i32, %c0_i32_0 : i32, i32
  }
  func.func @transform_5(%arg0: i32) -> (i32, i32) {
    %c0_i32 = arith.constant 0 : i32
    %c0_i32_0 = arith.constant 0 : i32
    return %arg0, %c0_i32 : i32, i32
  }
}

</mosaic_0001>

<llo_original>
// kernel: tpu_custom_call.1
$region0: #{tpu_custom_call.1}
  #allocation0 [shape = 'u32[]', space=smem, size = 0x4, offset = 0x4, fixed_abs, tag = 'smem constant byte address 0x4 - core index']
  #allocation1 [shape = 'u32[144,128]{1,0:T(1,128)}', space=vmem, size = 0x12000, scoped, tag = 'internal scratch']
  %s0 = inlined_call_operand.vmem [shape: f32[2,48], index: 0, kind: input, shape index: {}]
  %s1 = inlined_call_operand.vmem [shape: f32[48,256], index: 1, kind: input, shape index: {}]
  %s2 = inlined_call_operand.vmem [shape: f32[1,256], index: 2, kind: input, shape index: {}]
  %s3 = inlined_call_operand.vmem [shape: f32[128,32], index: 3, kind: input, shape index: {}]
  %s4 = inlined_call_operand.vmem [shape: f32[1,32], index: 4, kind: input, shape index: {}]
  %s5 = inlined_call_operand.hbm [shape: f32[2,32], index: 5, kind: output, shape index: {}]
  %s6 = sld [smem:[#allocation0]]
  $region30: #{tpu_custom_call.1} parent=0
    _
  %s8 = ssub.s32 1, %s6
  %s9 = scalar_select 0, %s8, %s6
  $region1: #{tpu_custom_call.1} parent=0
    #allocation2 [shape = 'u8[1024]{0}', space=vmem, size = 0x400, scoped, tag = 'output window, operand 0, single buffered']
    #allocation3 [shape = 's32[1]{0}', space=sflag, size = 0x4, scoped, tag = 'scoped memory for tpu_custom_call.1']
    %10 = vsyncpa [#allocation3], 0
    // Predicated region
    $region2: #{tpu_custom_call.1} parent=1 // pred_check
      _
    $region3: #{tpu_custom_call.1} parent=1 // pred_check_branch
      %12 = sbr.rel (0) target = $region5
    $region4: #{tpu_custom_call.1} parent=1 // pred_region
      _
    $region5: #{tpu_custom_call.1} parent=1 // pred_fallthru
      _
    // Predicated region
    $region6: #{tpu_custom_call.1} parent=1 // pred_check
      _
    $region7: #{tpu_custom_call.1} parent=1 // pred_check_branch
      %14 = sbr.rel (0) target = $region9
    $region8: #{tpu_custom_call.1} parent=1 // pred_region
      _
    $region9: #{tpu_custom_call.1} parent=1 // pred_fallthru
      _
    // Predicated region
    $region10: #{tpu_custom_call.1} parent=1 // pred_check
      _
    $region11: #{tpu_custom_call.1} parent=1 // pred_check_branch
      %16 = sbr.rel (0) target = $region13
    $region12: #{tpu_custom_call.1} parent=1 // pred_region
      _
    $region13: #{tpu_custom_call.1} parent=1 // pred_fallthru
      _
    // Predicated region
    $region14: #{tpu_custom_call.1} parent=1 // pred_check
      _
    $region15: #{tpu_custom_call.1} parent=1 // pred_check_branch
      %18 = sbr.rel (0) target = $region17
    $region16: #{tpu_custom_call.1} parent=1 // pred_region
      _
    $region17: #{tpu_custom_call.1} parent=1 // pred_fallthru
      _
    // Predicated region
    $region18: #{tpu_custom_call.1} parent=1 // pred_check
      _
    $region19: #{tpu_custom_call.1} parent=1 // pred_check_branch
      %20 = sbr.rel (0) target = $region21
    $region20: #{tpu_custom_call.1} parent=1 // pred_region
      _
    $region21: #{tpu_custom_call.1} parent=1 // pred_fallthru
      _
    %v21 = vld [vmem:[%s0] sm:$0x3]
    %v22 = vld [vmem:[%s1] sm:$0xff]
    %v23 = vld [vmem:[%s1 + $0x8] sm:$0xff]
    %v24 = vld [vmem:[%s1 + $0x10] sm:$0xff]
    %v25 = vld [vmem:[%s1 + $0x18] sm:$0xff]
    %v26 = vld [vmem:[%s1 + $0x20] sm:$0xff]
    %v27 = vld [vmem:[%s1 + $0x28] sm:$0xff]
    %v28 = vld [vmem:[%s1 + $0x30] sm:$0xff]
    %v29 = vld [vmem:[%s1 + $0x38] sm:$0xff]
    %v30 = vld [vmem:[%s1 + $0x40] sm:$0xff]
    %v31 = vld [vmem:[%s1 + $0x48] sm:$0xff]
    %v32 = vld [vmem:[%s1 + $0x50] sm:$0xff]
    %v33 = vld [vmem:[%s1 + $0x58] sm:$0xff]
    %v34 = vld [vmem:[%s2] sm:$0x3]
    %v36 = vlaneseq
    %v37 = vshrl.u32 %v36, 7
    %v38 = vsub.s32 0, %v37
    %v39 = vrot.slane %v34, %v38
    %v40 = vlaneseq
    %v41 = vshrl.u32 %v40, 7
    %v42 = vsub.s32 1, %v41
    %v43 = vrot.slane %v34, %v42
    %vm46 = vcmask 392192
    %v48 = vsel %vm46, %v21, 0
    %50 = vmatprep.subr.mxu0 %v23
    %51 = vmatpush1.msra.mxu0 %v22
    %52 = vmatprep.subr.mxu0 %v25
    %53 = vmatpush1.msra.mxu0 %v24
    %54 = vmatprep.subr.mxu0 %v27
    %55 = vmatpush1.msra.mxu0 %v26
    %56 = vmatprep.subr.mxu0 %v29
    %57 = vmatpush1.msra.mxu0 %v28
    %58 = vmatprep.subr.mxu0 %v31
    %59 = vmatpush1.msra.mxu0 %v30
    %60 = vmatprep.subr.mxu0 %v33
    %61 = vmatpush1.msra.mxu0 %v32
    %62 = vmatprep.subr.mxu0 0.0
    %63 = vmatpush1.msra.mxu0 0.0
    %64 = vmatprep.subr.mxu0 0.0
    %65 = vmatpush1.msra.mxu0 0.0
    %66 = vmatprep.subr.mxu0 0.0
    %67 = vmatpush1.msra.mxu0 0.0
    %68 = vmatprep.subr.mxu0 0.0
    %69 = vmatpush1.msra.mxu0 0.0
    %70 = vmatprep.subr.mxu0 0.0
    %71 = vmatpush1.msra.mxu0 0.0
    %72 = vmatprep.subr.mxu0 0.0
    %73 = vmatpush1.msra.mxu0 0.0
    %74 = vmatprep.subr.mxu0 0.0
    %75 = vmatpush1.msra.mxu0 0.0
    %76 = vmatprep.subr.mxu0 0.0
    %77 = vmatpush1.msra.mxu0 0.0
    %78 = vmatprep.subr.mxu0 0.0
    %79 = vmatpush1.msra.mxu0 0.0
    %80 = vmatprep.subr.mxu0 0.0
    %81 = vmatpush1.msra.mxu0 0.0
    %82 = vmatprep.subr.mxu0 0.0
    %83 = vmatpush1.msra.mxu0 0.0
    %84 = vmatprep.subr.mxu0 0.0
    %85 = vmatpush1.msra.mxu0 0.0
    %86 = vmatprep.subr.mxu0 0.0
    %87 = vmatpush1.msra.mxu0 0.0
    %88 = vmatprep.subr.mxu0 0.0
    %89 = vmatpush1.msra.mxu0 0.0
    %90 = vmatprep.subr.mxu0 0.0
    %91 = vmatpush1.msra.mxu0 0.0
    %92 = vmatprep.subr.mxu0 0.0
    %93 = vmatpush1.msra.mxu0 0.0
    %94 = vmatprep.subr.mxu0 0.0
    %95 = vmatpush1.msra.mxu0 0.0
    %96 = vmatprep.subr.mxu0 0.0
    %97 = vmatpush1.msra.mxu0 0.0
    %98 = vmatprep.subr.mxu0 0.0
    %99 = vmatpush1.msra.mxu0 0.0
    %100 = vmatprep.subr.mxu0 0.0
    %101 = vmatpush1.msra.mxu0 0.0
    %102 = vmatprep.subr.mxu0 0.0
    %103 = vmatpush1.msra.mxu0 0.0
    %104 = vmatprep.subr.mxu0 0.0
    %105 = vmatpush1.msra.mxu0 0.0
    %106 = vmatprep.subr.mxu0 0.0
    %107 = vmatpush1.msra.mxu0 0.0
    %108 = vmatprep.subr.mxu0 0.0
    %109 = vmatpush1.msra.mxu0 0.0
    %110 = vmatprep.subr.mxu0 0.0
    %111 = vmatpush1.msra.mxu0 0.0
    %112 = vmatprep.subr.mxu0 0.0
    %113 = vmatpush1.msra.mxu0 0.0
    %114 = vmatprep.mubr.f32.mxu0 0.0
    %115 = vmatmul.mubr.f32.gmra.mrb[0].mxu0 %v48
    %v116 = vpop.f32.mrb[0].mxu0
    %v117 = vadd.f32 %v39, %v116
    %v118 = vpop.f32.mrb[0].mxu0
    %v119 = vadd.f32 %v43, %v118
    %120 = vdwg.mxu0
    %v121 = vmul.f32 %v117, %v119
    %v122 = vld [vmem:[%s3] sm:$0xff]
    %v123 = vld [vmem:[%s3 + $0x8] sm:$0xff]
    %v124 = vld [vmem:[%s3 + $0x10] sm:$0xff]
    %v125 = vld [vmem:[%s3 + $0x18] sm:$0xff]
    %v126 = vld [vmem:[%s3 + $0x20] sm:$0xff]
    %v127 = vld [vmem:[%s3 + $0x28] sm:$0xff]
    %v128 = vld [vmem:[%s3 + $0x30] sm:$0xff]
    %v129 = vld [vmem:[%s3 + $0x38] sm:$0xff]
    %v130 = vld [vmem:[%s3 + $0x40] sm:$0xff]
    %v131 = vld [vmem:[%s3 + $0x48] sm:$0xff]
    %v132 = vld [vmem:[%s3 + $0x50] sm:$0xff]
    %v133 = vld [vmem:[%s3 + $0x58] sm:$0xff]
    %v134 = vld [vmem:[%s3 + $0x60] sm:$0xff]
    %v135 = vld [vmem:[%s3 + $0x68] sm:$0xff]
    %v136 = vld [vmem:[%s3 + $0x70] sm:$0xff]
    %v137 = vld [vmem:[%s3 + $0x78] sm:$0xff]
    %v138 = vld [vmem:[%s4] sm:$0x1]
    %v140 = vlaneseq
    %v141 = vshrl.u32 %v140, 7
    %v142 = vsub.s32 0, %v141
    %v143 = vrot.slane %v138, %v142
    %145 = vmatprep.subr.mxu0 0.0
    %146 = vmatpush1.msra.mxu0 %v122
    %147 = vmatprep.subr.mxu0 0.0
    %148 = vmatpush1.msra.mxu0 %v123
    %149 = vmatprep.subr.mxu0 0.0
    %150 = vmatpush1.msra.mxu0 %v124
    %151 = vmatprep.subr.mxu0 0.0
    %152 = vmatpush1.msra.mxu0 %v125
    %153 = vmatprep.subr.mxu0 0.0
    %154 = vmatpush1.msra.mxu0 %v126
    %155 = vmatprep.subr.mxu0 0.0
    %156 = vmatpush1.msra.mxu0 %v127
    %157 = vmatprep.subr.mxu0 0.0
    %158 = vmatpush1.msra.mxu0 %v128
    %159 = vmatprep.subr.mxu0 0.0
    %160 = vmatpush1.msra.mxu0 %v129
    %161 = vmatprep.subr.mxu0 0.0
    %162 = vmatpush1.msra.mxu0 %v130
    %163 = vmatprep.subr.mxu0 0.0
    %164 = vmatpush1.msra.mxu0 %v131
    %165 = vmatprep.subr.mxu0 0.0
    %166 = vmatpush1.msra.mxu0 %v132
    %167 = vmatprep.subr.mxu0 0.0
    %168 = vmatpush1.msra.mxu0 %v133
    %169 = vmatprep.subr.mxu0 0.0
    %170 = vmatpush1.msra.mxu0 %v134
    %171 = vmatprep.subr.mxu0 0.0
    %172 = vmatpush1.msra.mxu0 %v135
    %173 = vmatprep.subr.mxu0 0.0
    %174 = vmatpush1.msra.mxu0 %v136
    %175 = vmatprep.subr.mxu0 0.0
    %176 = vmatpush1.msra.mxu0 %v137
    %177 = vmatprep.subr.mxu0 0.0
    %178 = vmatpush1.msra.mxu0 0.0
    %179 = vmatprep.subr.mxu0 0.0
    %180 = vmatpush1.msra.mxu0 0.0
    %181 = vmatprep.subr.mxu0 0.0
    %182 = vmatpush1.msra.mxu0 0.0
    %183 = vmatprep.subr.mxu0 0.0
    %184 = vmatpush1.msra.mxu0 0.0
    %185 = vmatprep.subr.mxu0 0.0
    %186 = vmatpush1.msra.mxu0 0.0
    %187 = vmatprep.subr.mxu0 0.0
    %188 = vmatpush1.msra.mxu0 0.0
    %189 = vmatprep.subr.mxu0 0.0
    %190 = vmatpush1.msra.mxu0 0.0
    %191 = vmatprep.subr.mxu0 0.0
    %192 = vmatpush1.msra.mxu0 0.0
    %193 = vmatprep.subr.mxu0 0.0
    %194 = vmatpush1.msra.mxu0 0.0
    %195 = vmatprep.subr.mxu0 0.0
    %196 = vmatpush1.msra.mxu0 0.0
    %197 = vmatprep.subr.mxu0 0.0
    %198 = vmatpush1.msra.mxu0 0.0
    %199 = vmatprep.subr.mxu0 0.0
    %200 = vmatpush1.msra.mxu0 0.0
    %201 = vmatprep.subr.mxu0 0.0
    %202 = vmatpush1.msra.mxu0 0.0
    %203 = vmatprep.subr.mxu0 0.0
    %204 = vmatpush1.msra.mxu0 0.0
    %205 = vmatprep.subr.mxu0 0.0
    %206 = vmatpush1.msra.mxu0 0.0
    %207 = vmatprep.subr.mxu0 0.0
    %208 = vmatpush1.msra.mxu0 0.0
    %209 = vmatprep.mubr.f32.mxu0 0.0
    %210 = vmatmul.mubr.f32.gmra.mrb[0].mxu0 %v121
    %v211 = vpop.f32.mrb[0].mxu0
    %v212 = vadd.f32 %v143, %v211
    %v213 = vpop.f32.mrb[0].mxu0
    %214 = vdwg.mxu0
    %vm215 = vcmask 254976
    %216 = vst.msk [vmem:[#allocation2] sm:$0x3] %vm215, %v212
    // Predicated region
    $region22: #{tpu_custom_call.1} parent=1 // pred_check
      _
    $region23: #{tpu_custom_call.1} parent=1 // pred_check_branch
      %218 = sbr.rel (0) target = $region25
    $region24: #{tpu_custom_call.1} parent=1 // pred_region
      %s220 = ssub.s32 32, 32
      %221 = vsyncadd [#allocation3], %s220
      %s223 = sshll.u32 [#allocation2], 4
      %s224 = int_to_ptr.vmem [resolvable:$true] %s223
      %226 = dma.vmem_to_hbm [thread:$0]  %s224, 32, %s5, [#allocation3]
    $region25: #{tpu_custom_call.1} parent=1 // pred_fallthru
      _
    // Predicated region
    $region26: #{tpu_custom_call.1} parent=1 // pred_check
      _
    $region27: #{tpu_custom_call.1} parent=1 // pred_check_branch
      %228 = sbr.rel (0) target = $region29
    $region28: #{tpu_custom_call.1} parent=1 // pred_region
      %229 = dma.done [#allocation3], 32
    $region29: #{tpu_custom_call.1} parent=1 // pred_fallthru
      _
    %230 = vsyncpa [#allocation3], 1

</llo_original>
